<compile_context>
chip_gen: v5e
topology: v5e:2x2
jax: 0.10.0
libtpu: 0.0.40
codegen_flags: <defaults>
</compile_context>

<pallas_src>
import jax
import jax.numpy as jnp
from jax import lax
from jax.experimental import pallas as pl
from jax.experimental.pallas import tpu as pltpu


def _round_up(a, m):
    return ((a + m - 1) // m) * m


def _min_identity(dtype):
    """Dtype-aware identity for max (matches jax.ops.segment_max)."""
    dtype = jnp.dtype(dtype)
    if jnp.issubdtype(dtype, jnp.floating):
        return jnp.array(-jnp.inf, dtype)
    if jnp.issubdtype(dtype, jnp.integer):
        return jnp.array(jnp.iinfo(dtype).min, dtype)
    raise TypeError(f"unsupported dtype for global_max_pool: {dtype}")


def _global_max_pool_kernel(first_ref, last_ref, batch_ref, x_ref, out_ref):
    neg = _min_identity(out_ref.dtype)

    # First node tile for this feature tile: init the resident accumulator.
    @pl.when(pl.program_id(1) == 0)
    def _():
        out_ref[...] = jnp.full(out_ref.shape, neg, out_ref.dtype)

    t = pl.program_id(1)
    lo = first_ref[t]          # first graph id present in this node tile
    hi = last_ref[t]           # last graph id present in this node tile

    x = x_ref[...]                                   # (tile_n, tile_f)
    b_idx = batch_ref[...]                           # (tile_n, 1) int32
    neg_x = jnp.full(x.shape, neg, x.dtype)
    row_ids = lax.broadcasted_iota(jnp.int32, (out_ref.shape[0], 1), 0)

    acc0 = out_ref[...]                              # one whole-block load

    def body(b, acc):
        node_mask = b_idx == b                       # (tile_n, 1)
        cur = jnp.max(jnp.where(node_mask, x, neg_x), axis=0, keepdims=True)
        # Fold this graph's row into the accumulator block.
        return jnp.where(row_ids == b, jnp.maximum(acc, cur), acc)

    # Only loop over graphs actually present in this tile.
    out_ref[...] = lax.fori_loop(lo, hi + 1, body, acc0)  # one block store


def global_max_pool(x, batch, num_graphs, *, tile_n=None,
                    x_vmem_budget_bytes=8 << 20):
    """Pallas segment-max pooling: x [N, F], batch [N] -> [num_graphs, F]."""
    N, F = x.shape
    dtype = x.dtype
    itemsize = jnp.dtype(dtype).itemsize
    # Sublane packing: 8 rows for 4-byte, 16 for 2-byte, 32 for 1-byte dtypes.
    sub_mult = max(8, 32 // itemsize)

    # Feature tiling: lane-dense chunks when F is large & 128-aligned; this
    # also gives a "parallel" axis for the two TensorCores on v7x.
    if F % 128 == 0 and F > 512:
        tile_f = 512
    else:
        tile_f = F
    num_f_tiles = pl.cdiv(F, tile_f)

    # Node tile: as large as the VMEM budget allows (double-buffered x block),
    # capped so tiny inputs don't over-allocate.
    if tile_n is None:
        tile_n = x_vmem_budget_bytes // (2 * tile_f * itemsize)
        tile_n = min(int(tile_n), 2048)
    tile_n = max(sub_mult, (int(tile_n) // sub_mult) * sub_mult)
    tile_n = min(tile_n, _round_up(N, sub_mult))

    n_tiles = pl.cdiv(N, tile_n)
    n_pad = n_tiles * tile_n
    pad = n_pad - N

    # Only the cheap [N] int32 batch vector is padded; x is streamed as-is and
    # the undefined tail rows of the last x block are masked by the padded ids.
    batch_i32 = batch.astype(jnp.int32)
    batch_hi = jnp.pad(batch_i32, (0, pad), constant_values=num_graphs)
    batch_lo = jnp.pad(batch_i32, (0, pad), constant_values=-1)

    # Per-node-tile graph-id bounds (scalar-prefetched into SMEM). Tight
    # (1-2 graphs/tile) for PyG-sorted batch vectors; still correct otherwise.
    tile_first = jnp.clip(batch_hi.reshape(n_tiles, tile_n).min(axis=1),
                          0, num_graphs - 1)
    tile_last = jnp.clip(batch_lo.reshape(n_tiles, tile_n).max(axis=1),
                         0, num_graphs - 1)

    batch2d = batch_hi.reshape(n_pad, 1)

    # Explicit VMEM limit so the enlarged tiles stay inside v7x's 64 MiB too.
    x_blk = tile_n * tile_f * itemsize
    out_blk = num_graphs * tile_f * itemsize
    needed = 2 * (x_blk + tile_n * 4 + out_blk)
    vmem_limit = int(min(max(needed + (8 << 20), 16 << 20), 48 << 20))

    grid = (num_f_tiles, n_tiles)
    out = pl.pallas_call(
        _global_max_pool_kernel,
        out_shape=jax.ShapeDtypeStruct((num_graphs, F), dtype),
        grid_spec=pltpu.PrefetchScalarGridSpec(
            num_scalar_prefetch=2,
            grid=grid,
            in_specs=[
                pl.BlockSpec((tile_n, 1), lambda j, i, first, last: (i, 0)),
                pl.BlockSpec((tile_n, tile_f), lambda j, i, first, last: (i, j)),
            ],
            out_specs=pl.BlockSpec((num_graphs, tile_f),
                                   lambda j, i, first, last: (0, j)),
        ),
        compiler_params=pltpu.CompilerParams(
            dimension_semantics=("parallel", "arbitrary"),
            vmem_limit_bytes=vmem_limit,
        ),
    )(tile_first, tile_last, batch2d, x)
    return out


if __name__ == "__main__":
    key = jax.random.PRNGKey(0)
    k1, k2 = jax.random.split(key)

    # Test 1: small PyG-style batch — N=16 nodes, F=32 features, B=3 graphs.
    N, F, B = 16, 32, 3
    x = jax.random.normal(k1, (N, F), dtype=jnp.float32)
    batch = jnp.array([0] * 6 + [1] * 5 + [2] * 5, dtype=jnp.int32)

    out = jax.block_until_ready(global_max_pool(x, batch, num_graphs=B))
    ref = jax.ops.segment_max(x, batch, num_segments=B)
    assert out.shape == (B, F), out.shape
    assert out.dtype == x.dtype, out.dtype
    assert jnp.array_equal(out, ref), "mismatch vs reference (test 1)"

    # Test 2: non-tile-aligned N, multi-tile reduction, several graphs per tile.
    N2, F2, B2 = 19, 160, 4
    x2 = jax.random.normal(k2, (N2, F2), dtype=jnp.float32)
    sizes = [7, 5, 4, 3]
    batch2 = jnp.concatenate(
        [jnp.full((s,), g, jnp.int32) for g, s in enumerate(sizes)])
    out2 = jax.block_until_ready(
        global_max_pool(x2, batch2, num_graphs=B2, tile_n=8))
    ref2 = jax.ops.segment_max(x2, batch2, num_segments=B2)
    assert jnp.array_equal(out2, ref2), "mismatch vs reference (test 2)"

    print("KERNEL_OK")
</pallas_src>

<mosaic_0001>
module attributes {stable_mosaic.version = 11 : i64} {
  func.func @_global_max_pool_kernel(%arg0: i32, %arg1: i32, %arg2: memref<1xi32, #tpu.memory_space<smem>>, %arg3: memref<1xi32, #tpu.memory_space<smem>>, %arg4: memref<16x1xi32, #tpu.memory_space<vmem>>, %arg5: memref<16x32xf32, #tpu.memory_space<vmem>>, %arg6: memref<3x32xf32, #tpu.memory_space<vmem>>) attributes {dimension_semantics = [#tpu.dimension_semantics<parallel>, #tpu.dimension_semantics<arbitrary>], iteration_bounds = array<i64: 1, 1>, scalar_prefetch = 2 : i64, scratch_operands = 0 : i64, tpu.core_type = #tpu.core_type<tc>, window_params = [{transform_indices = @transform_0, window_bounds = array<i64: 16, 1>}, {transform_indices = @transform_1, window_bounds = array<i64: 16, 32>}, {transform_indices = @transform_2, window_bounds = array<i64: 3, 32>}]} {
    %c0_i32 = arith.constant 0 : i32
    %0 = arith.cmpi eq, %arg1, %c0_i32 : i32
    %1 = arith.extui %0 : i1 to i32
    %cst = arith.constant 0xFF800000 : f32
    %c0_i32_0 = arith.constant 0 : i32
    %2 = arith.cmpi ne, %1, %c0_i32_0 : i32
    scf.if %2 {
      %17 = vector.broadcast %cst : f32 to vector<3x32xf32>
      %c0_10 = arith.constant 0 : index
      %c0_11 = arith.constant 0 : index
      %18 = vector.load %arg6[%c0_10, %c0_11] : memref<3x32xf32, #tpu.memory_space<vmem>>, vector<3x32xf32>
      tpu.vector_store %arg6[%c0_10, %c0_11], %17 {strides = array<i32>} : memref<3x32xf32, #tpu.memory_space<vmem>>, vector<3x32xf32>,
    } else {
    }
    %3 = arith.index_cast %arg1 : i32 to index
    %4 = memref.load %arg2[%3] : memref<1xi32, #tpu.memory_space<smem>>
    %5 = arith.index_cast %arg1 : i32 to index
    %6 = memref.load %arg3[%5] : memref<1xi32, #tpu.memory_space<smem>>
    %c0 = arith.constant 0 : index
    %c0_1 = arith.constant 0 : index
    %7 = vector.load %arg5[%c0, %c0_1] : memref<16x32xf32, #tpu.memory_space<vmem>>, vector<16x32xf32>
    %c0_2 = arith.constant 0 : index
    %c0_3 = arith.constant 0 : index
    %8 = vector.load %arg4[%c0_2, %c0_3] : memref<16x1xi32, #tpu.memory_space<vmem>>, vector<16x1xi32>
    %cst_4 = arith.constant 0xFF800000 : f32
    %9 = vector.broadcast %cst_4 : f32 to vector<16x32xf32>
    %10 = tpu.iota {dimensions = array<i32: 0>} : vector<3x1xi32>
    %c0_5 = arith.constant 0 : index
    %c0_6 = arith.constant 0 : index
    %11 = vector.load %arg6[%c0_5, %c0_6] : memref<3x32xf32, #tpu.memory_space<vmem>>, vector<3x32xf32>
    %c1_i32 = arith.constant 1 : i32
    %12 = arith.addi %6, %c1_i32 : i32
    %13 = arith.subi %12, %4 : i32
    %14 = arith.addi %4, %13 : i32
    %c1_i32_7 = arith.constant 1 : i32
    %15 = scf.for %arg7 = %4 to %14 step %c1_i32_7 iter_args(%arg8 = %11) -> (vector<3x32xf32>)  : i32 {
      %17 = vector.broadcast %arg7 : i32 to vector<16x1xi32>
      %18 = arith.cmpi eq, %8, %17 : vector<16x1xi32>
      %19 = vector.shape_cast %18 : vector<16x1xi1> to vector<16x1xi1>
      %20 = vector.broadcast %19 : vector<16x1xi1> to vector<16x32xi1>
      %21 = arith.select %20, %7, %9 : vector<16x32xi1>, vector<16x32xf32>
      %cst_10 = arith.constant dense<0xFF800000> : vector<32xf32>
      %22 = vector.multi_reduction <maximumf>, %21, %cst_10 [0] : vector<16x32xf32> to vector<32xf32>
      %23 = vector.shape_cast %22 : vector<32xf32> to vector<1x32xf32>
      %24 = vector.broadcast %arg7 : i32 to vector<3x1xi32>
      %25 = arith.cmpi eq, %10, %24 : vector<3x1xi32>
      %26 = vector.broadcast %23 : vector<1x32xf32> to vector<3x32xf32>
      %27 = arith.maximumf %arg8, %26 : vector<3x32xf32>
      %28 = vector.shape_cast %25 : vector<3x1xi1> to vector<3x1xi1>
      %29 = vector.broadcast %28 : vector<3x1xi1> to vector<3x32xi1>
      %30 = arith.select %29, %27, %arg8 : vector<3x32xi1>, vector<3x32xf32>
      scf.yield %30 : vector<3x32xf32>
    }
    %c0_8 = arith.constant 0 : index
    %c0_9 = arith.constant 0 : index
    %16 = vector.load %arg6[%c0_8, %c0_9] : memref<3x32xf32, #tpu.memory_space<vmem>>, vector<3x32xf32>
    tpu.vector_store %arg6[%c0_8, %c0_9], %15 {strides = array<i32>} : memref<3x32xf32, #tpu.memory_space<vmem>>, vector<3x32xf32>,
    return
  }
  func.func @transform_0(%arg0: i32, %arg1: i32, %arg2: memref<1xi32, #tpu.memory_space<smem>>, %arg3: memref<1xi32, #tpu.memory_space<smem>>) -> (i32, i32) {
    %c0_i32 = arith.constant 0 : i32
    %c0_i32_0 = arith.constant 0 : i32
    return %arg1, %c0_i32 : i32, i32
  }
  func.func @transform_1(%arg0: i32, %arg1: i32, %arg2: memref<1xi32, #tpu.memory_space<smem>>, %arg3: memref<1xi32, #tpu.memory_space<smem>>) -> (i32, i32) {
    %c0_i32 = arith.constant 0 : i32
    return %arg1, %arg0 : i32, i32
  }
  func.func @transform_2(%arg0: i32, %arg1: i32, %arg2: memref<1xi32, #tpu.memory_space<smem>>, %arg3: memref<1xi32, #tpu.memory_space<smem>>) -> (i32, i32) {
    %c0_i32 = arith.constant 0 : i32
    %c0_i32_0 = arith.constant 0 : i32
    return %c0_i32, %arg0 : i32, i32
  }
}

</mosaic_0001>

<llo_original>
// kernel: tpu_custom_call.1
$region0: #{tpu_custom_call.1}
  #allocation0 [shape = 'u32[]', space=smem, size = 0x4, offset = 0x4, fixed_abs, tag = 'smem constant byte address 0x4 - core index']
  #allocation1 [shape = 'u32[72,128]{1,0:T(1,128)}', space=vmem, size = 0x9000, scoped, tag = 'internal scratch']
  #allocation2 [shape = 's32[1]{0}', space=sflag, size = 0x4, scoped, tag = 'scoped memory for tpu_custom_call.1']
  #allocation3 [shape = 's32[1]{0:T(128)S(6)}', space=smem, size = 0x200, scoped, tag = 'prefetched SMEM operand 0']
  #allocation4 [shape = 's32[1]{0:T(128)S(6)}', space=smem, size = 0x200, scoped, tag = 'prefetched SMEM operand 1']
  %s0 = inlined_call_operand.<no memory space> [shape: s32[1], index: 0, kind: input, shape index: {}]
  %s1 = inlined_call_operand.<no memory space> [shape: s32[1], index: 1, kind: input, shape index: {}]
  %s2 = inlined_call_operand.vmem [shape: s32[16,1], index: 2, kind: input, shape index: {}]
  %s3 = inlined_call_operand.vmem [shape: f32[16,32], index: 3, kind: input, shape index: {}]
  %s4 = inlined_call_operand.hbm [shape: f32[3,32], index: 4, kind: output, shape index: {}]
  %s5 = sld [smem:[#allocation0]]
  $region29: #{tpu_custom_call.1} parent=0
    _
  %s7 = ssub.s32 1, %s5
  %s8 = scalar_select 0, %s7, %s5
  %9 = sst [smem:[#allocation3]] %s0
  %10 = sst [smem:[#allocation4]] %s1
  $region1: #{tpu_custom_call.1} parent=0
    #allocation5 [shape = 'u8[2048]{0}', space=vmem, size = 0x800, scoped, tag = 'output window, operand 0, single buffered']
    #allocation6 [shape = 's32[1]{0}', space=sflag, size = 0x4, scoped, tag = 'scoped memory for tpu_custom_call.1']
    %11 = vsyncpa [#allocation6], 0
    // Predicated region
    $region2: #{tpu_custom_call.1} parent=1 // pred_check
      _
    $region3: #{tpu_custom_call.1} parent=1 // pred_check_branch
      %13 = sbr.rel (0) target = $region5
    $region4: #{tpu_custom_call.1} parent=1 // pred_region
      _
    $region5: #{tpu_custom_call.1} parent=1 // pred_fallthru
      _
    // Predicated region
    $region6: #{tpu_custom_call.1} parent=1 // pred_check
      _
    $region7: #{tpu_custom_call.1} parent=1 // pred_check_branch
      %15 = sbr.rel (0) target = $region9
    $region8: #{tpu_custom_call.1} parent=1 // pred_region
      _
    $region9: #{tpu_custom_call.1} parent=1 // pred_fallthru
      _
    %p16 = scmp.eq.s32.totalorder 0, 0
    // Predicated region
    $region10: #{tpu_custom_call.1} parent=1 // pred_check
      %p17 = pneg %p16
    $region11: #{tpu_custom_call.1} parent=1 // pred_check_branch
      %19 = sbr.rel (%p17) target = $region13
    $region12: #{tpu_custom_call.1} parent=1 // pred_region
      %vm20 = vcmask 256000
      %21 = vst.msk [vmem:[#allocation5] sm:$0x7] %vm20, -inf
    $region13: #{tpu_custom_call.1} parent=1 // pred_fallthru
      _
    %s22 = sld [smem:[#allocation3]]
    %s23 = sld [smem:[#allocation4]]
    %v24 = vld [vmem:[%s3] sm:$0xff]
    %v25 = vld [vmem:[%s3 + $0x8] sm:$0xff]
    %v26 = vld [vmem:[%s2] sm:$0xff]
    %v27 = vld [vmem:[%s2 + $0x8] sm:$0xff]
    %v28 = vlaneseq
    %v29 = vshrl.u32 %v28, 7
    %v30 = vld [vmem:[#allocation5] sm:$0x7]
    %s31 = sadd.s32 %s23, 1
    // While loop
    $region14: #{tpu_custom_call.1} parent=1 // loop_pre_header
      _
    $region15: #{tpu_custom_call.1} parent=1 // loop_header
      %s33 = sphi %s22, %s35
      %p34 = scmp.ge.s32.totalorder %s33, %s31
      %v38 = vphi %v30, %v68
    $region16: #{tpu_custom_call.1} parent=1 // loop_header_branch
      %37 = sbr.rel (%p34) target = $region20
    $region17: #{tpu_custom_call.1} parent=1 // loop_body
      %v39 = vstv %s33
      %vm40 = vcmp.eq.s32.totalorder %v26, %v39
      %vm41 = vcmp.eq.s32.totalorder %v27, %v39
      %v42 = vsel %vm40, 1, 0
      %v43 = vsel %vm41, 1, 0
      %44 = vset.pattern.permute.xlu0 0
      %45 = vperm.xlu0 %44, %v42
      %v46 = vpop.permute.xlu0 %45
      %47 = vset.pattern.permute.xlu0 0
      %48 = vperm.xlu0 %47, %v43
      %v49 = vpop.permute.xlu0 %48
      %vm50 = vcmp.eq.s32.totalorder %v46, 1
      %vm51 = vcmp.eq.s32.totalorder %v49, 1
      %v52 = vsel %vm50, %v24, -inf
      %v53 = vsel %vm51, %v25, -inf
      %vm54 = vcmask 261120
      %v55 = vsel %vm54, %v52, -inf
      %v56 = vsel %vm54, %v53, -inf
      %v57 = vmax.f32 %v55, %v56
      %v58 = vrot.slane %v57, 4
      %v59 = vmax.f32 %v57, %v58
      %v60 = vrot.slane %v59, 2
      %v61 = vmax.f32 %v59, %v60
      %v62 = vrot.slane %v61, 1
      %v63 = vmax.f32 %v61, %v62
      %vm64 = vcmp.eq.s32.totalorder %v29, %v39
      %v65 = vmax.f32 %v38, %v63
      %v66 = vsel %vm64, 1, 0
      %vm67 = vcmp.eq.s32.totalorder %v66, 1
      %v68 = vsel %vm67, %v65, %v38
    $region18: #{tpu_custom_call.1} parent=1 // loop_footer
      %s35 = sadd.s32 %s33, 1
    $region19: #{tpu_custom_call.1} parent=1 // loop_footer_branch
      %32 = sbr.rel target = $region15
    $region20: #{tpu_custom_call.1} parent=1 // loop_exit
      _
    %vm69 = vcmask 256000
    %70 = vst.msk [vmem:[#allocation5] sm:$0x7] %vm69, %v38
    // Predicated region
    $region21: #{tpu_custom_call.1} parent=1 // pred_check
      _
    $region22: #{tpu_custom_call.1} parent=1 // pred_check_branch
      %72 = sbr.rel (0) target = $region24
    $region23: #{tpu_custom_call.1} parent=1 // pred_region
      %74 = vsyncadd [#allocation6], 0
      %s76 = sshll.u32 [#allocation5], 4
      %s77 = int_to_ptr.vmem [resolvable:$true] %s76
      %s78 = sshll.u32 %s4, 4
      %s79 = int_to_ptr.hbm [resolvable:$true] %s78
      %81 = dma.vmem_to_hbm [thread:$0]  %s77, 64, %s79, [#allocation6]
    $region24: #{tpu_custom_call.1} parent=1 // pred_fallthru
      _
    // Predicated region
    $region25: #{tpu_custom_call.1} parent=1 // pred_check
      _
    $region26: #{tpu_custom_call.1} parent=1 // pred_check_branch
      %83 = sbr.rel (0) target = $region28
    $region27: #{tpu_custom_call.1} parent=1 // pred_region
      %85 = dma.done [#allocation6], 64
    $region28: #{tpu_custom_call.1} parent=1 // pred_fallthru
      _
    %86 = vsyncpa [#allocation6], 1

</llo_original>
